<compile_context>
chip_gen: v6e
topology: v6e:2x2x1
jax: 0.10.0
libtpu: 0.0.40
codegen_flags: <defaults>
</compile_context>

<pallas_src>
import math

import jax
import jax.numpy as jnp
from jax.experimental import pallas as pl
from jax.experimental.pallas import tpu as pltpu


def _round_up(v, m):
    return ((v + m - 1) // m) * m


def ada_linear_kernel(x_ref, w_ref, bias_ref, gama_ref, beta_ref, o_ref):
    # x_ref:    (TB, TS, In_p)      VMEM, matmul dtype
    # w_ref:    (In_p, 2*TN)        VMEM, [ (W*W)^T | W^T ] for this N tile
    # bias_ref: (1, TN)             VMEM, f32
    # gama_ref: (B,)  beta_ref: (B,)  SMEM, f32 scalars
    # o_ref:    (TB, TS, TN)
    TB, TS, In_p = x_ref.shape
    TN = o_ref.shape[-1]
    b0 = pl.program_id(1) * TB

    # One fused MXU matmul per grid step (f32 accumulation).
    xf = x_ref[...].reshape(TB * TS, In_p)
    y = jnp.dot(xf, w_ref[...], preferred_element_type=jnp.float32)  # (TB*TS, 2*TN)

    bias = bias_ref[...].astype(jnp.float32)  # (1, TN)

    # Per-batch-element epilogue; gama/beta are SMEM scalars broadcast by the VPU.
    for t in range(TB):  # TB kept small by the wrapper -> cheap static unroll
        g = gama_ref[b0 + t]
        bt = beta_ref[b0 + t]
        y_t = y[t * TS:(t + 1) * TS, :]
        # out = g*(x @ (W*W)^T) + bt*(x @ W^T) + (bias*(g+1) + bt)
        out_t = g * y_t[:, :TN] + bt * y_t[:, TN:] + (bias * (g + 1.0) + bt)
        o_ref[t] = out_t.astype(o_ref.dtype)


def _select_tiles(B, S, In_p, Out_p, bytes_mm, bytes_out, target_rows,
                  vmem_budget, tb_cap=16):
    # N tile: largest multiple of 128 dividing Out_p whose combined-weight
    # block stays small enough to keep resident in VMEM.
    TN = 128
    for cand in (Out_p, 1024, 512, 256, 128):
        if cand % 128 == 0 and Out_p % cand == 0 and \
                In_p * 2 * cand * bytes_mm <= (6 << 20):
            TN = cand
            break
    weight_block = In_p * 2 * TN * bytes_mm

    # Row budget for the double-buffered x/out blocks + f32 intermediates.
    dyn_budget = max(vmem_budget - 2 * weight_block, 4 << 20)
    per_row = 2 * In_p * bytes_mm + TN * (2 * bytes_out + 16)
    max_rows = max(8, dyn_budget // per_row)
    rows = int(max(8, min(max_rows, target_rows)))

    S8 = _round_up(S, 8)
    TS = S8 if S8 <= rows else max(8, (rows // 8) * 8)
    S_p = _round_up(S, TS)
    ns = S_p // TS
    nn = Out_p // TN

    cap_tb = max(1, min(B, tb_cap, rows // TS))
    if B >= 2 and nn * ns == 1:
        # Keep at least 2 grid steps: DMA/compute overlap + dual-TC use on v7x.
        cap_tb = min(cap_tb, max(1, B // 2))
    TB = 1
    for tb in range(cap_tb, 0, -1):
        if B % tb == 0:
            TB = tb
            break
    return TB, TS, TN, S_p


def ada_linear(x, weight, bias, gama, beta, *, matmul_dtype=jnp.bfloat16,
               target_rows=1024, vmem_budget_bytes=40 << 20):
    """x: [B, S, in], weight: [out, in], bias: [out], gama/beta: [B, 1].

    matmul_dtype=jnp.bfloat16 (default) feeds the MXU native bf16 operands with
    f32 accumulation; pass jnp.float32 for exact-f32 parity with PyTorch.
    """
    B, S, In = x.shape
    Out, In_w = weight.shape
    assert In_w == In, "weight/in_features mismatch"
    out_dtype = x.dtype
    mm_dtype = jnp.dtype(matmul_dtype)
    bytes_mm = mm_dtype.itemsize
    bytes_out = jnp.dtype(out_dtype).itemsize

    In_p = _round_up(In, 128)
    Out_p = _round_up(Out, 128)

    TB, TS, TN, S_p = _select_tiles(B, S, In_p, Out_p, bytes_mm, bytes_out,
                                    target_rows, vmem_budget_bytes)
    nn, nb, ns = Out_p // TN, B // TB, S_p // TS

    # Grid-invariant MXU operand: per N-tile interleaved [ (W*W)^T | W^T ],
    # padded + transposed once, so the kernel runs one matmul per grid step.
    w32 = weight.astype(jnp.float32)
    w_pad = jnp.pad(w32, ((0, Out_p - Out), (0, In_p - In)))   # (Out_p, In_p)
    wsqT = (w_pad * w_pad).T                                   # (In_p, Out_p)
    wT = w_pad.T                                               # (In_p, Out_p)
    w_comb = jnp.concatenate(
        [wsqT.reshape(In_p, nn, TN), wT.reshape(In_p, nn, TN)], axis=2
    ).reshape(In_p, 2 * Out_p).astype(mm_dtype)

    bias_pad = jnp.pad(bias.astype(jnp.float32), (0, Out_p - Out)).reshape(1, Out_p)

    xw = x if x.dtype == mm_dtype else x.astype(mm_dtype)
    if S_p != S or In_p != In:
        xw = jnp.pad(xw, ((0, 0), (0, S_p - S), (0, In_p - In)))

    gama1d = gama.reshape(B).astype(jnp.float32)
    beta1d = beta.reshape(B).astype(jnp.float32)

    # Real VMEM footprint -> explicit scoped-VMEM limit (clamped under v7x 64MiB).
    footprint = (2 * TB * TS * In_p * bytes_mm      # x (double-buffered)
                 + 2 * In_p * 2 * TN * bytes_mm     # weights (worst case: double)
                 + 2 * TN * 4                       # bias
                 + 2 * TB * TS * TN * bytes_out     # out (double-buffered)
                 + TB * TS * 2 * TN * 4             # y (f32 matmul result)
                 + 4 * TB * TS * TN * 4)            # epilogue temporaries / slack
    vmem_limit = int(min(max(footprint + (4 << 20), 32 << 20), 64 << 20))

    def run(single_buffer_weights):
        if single_buffer_weights:
            # Constant index_map -> single buffer halves resident-weight VMEM.
            w_spec = pl.BlockSpec((In_p, 2 * TN), lambda n, b, s: (0, n),
                                  pipeline_mode=pl.Buffered(1))
        else:
            w_spec = pl.BlockSpec((In_p, 2 * TN), lambda n, b, s: (0, n))
        grid_spec = pl.GridSpec(
            grid=(nn, nb, ns),
            in_specs=[
                pl.BlockSpec((TB, TS, In_p), lambda n, b, s: (b, s, 0)),  # x
                w_spec,                                                   # [Wsq|W]^T
                pl.BlockSpec((1, TN), lambda n, b, s: (0, n)),            # bias
                pl.BlockSpec(memory_space=pltpu.MemorySpace.SMEM),        # gama
                pl.BlockSpec(memory_space=pltpu.MemorySpace.SMEM),        # beta
            ],
            out_specs=pl.BlockSpec((TB, TS, TN), lambda n, b, s: (b, s, n)),
        )
        return pl.pallas_call(
            ada_linear_kernel,
            out_shape=jax.ShapeDtypeStruct((B, S_p, Out_p), out_dtype),
            grid_spec=grid_spec,
            compiler_params=pltpu.CompilerParams(
                dimension_semantics=("parallel", "parallel", "parallel"),
                vmem_limit_bytes=vmem_limit),
        )(xw, w_comb, bias_pad, gama1d, beta1d)

    try:
        out_padded = jax.block_until_ready(run(True))
    except Exception:
        # pl.Buffered(1) single-buffering unsupported on this jax/libtpu combo:
        # fall back to default double-buffered resident weights.
        out_padded = jax.block_until_ready(run(False))

    if S_p != S or Out_p != Out:
        return out_padded[:, :S, :Out]
    return out_padded


def ada_linear_ref(x, weight, bias, gama, beta):
    """Pure-JAX reference matching the PyTorch semantics."""
    B = x.shape[0]
    g_w = gama.reshape(B, 1, 1)
    b_w = beta.reshape(B, 1, 1)
    w_new = (weight[None] * g_w + b_w) * weight[None]                            # [B,out,in]
    b_new = (bias[None] * gama.reshape(B, 1) + beta.reshape(B, 1)) + bias[None]  # [B,out]
    return jnp.einsum("bsi,boi->bso", x, w_new) + b_new[:, None, :]


if __name__ == "__main__":
    B, S, IN, OUT = 2, 8, 32, 32

    key = jax.random.PRNGKey(0)
    k_x, k_w, k_b, k_g, k_bt = jax.random.split(key, 5)

    # Deterministic init mimicking nn.Linear.reset_parameters:
    # kaiming_uniform_(a=sqrt(5)) -> U(-1/sqrt(fan_in), 1/sqrt(fan_in))
    bound = 1.0 / math.sqrt(IN)
    weight = jax.random.uniform(k_w, (OUT, IN), jnp.float32, -bound, bound)
    bias = jax.random.uniform(k_b, (OUT,), jnp.float32, -bound, bound)

    x = jax.random.normal(k_x, (B, S, IN), jnp.float32)
    gama = jax.random.normal(k_g, (B, 1), jnp.float32)
    beta = jax.random.normal(k_bt, (B, 1), jnp.float32)

    ref = ada_linear_ref(x, weight, bias, gama, beta)

    # Default fast path: bf16 MXU operands, f32 accumulation + f32 epilogue.
    out_bf16 = jax.block_until_ready(ada_linear(x, weight, bias, gama, beta))
    assert out_bf16.shape == (B, S, OUT)
    assert jnp.allclose(out_bf16, ref, rtol=2e-2, atol=3e-2), "bf16 path mismatch"

    # Exact-precision opt-in path (f32 MXU operands): tight tolerance.
    out_f32 = jax.block_until_ready(
        ada_linear(x, weight, bias, gama, beta, matmul_dtype=jnp.float32))
    assert out_f32.shape == (B, S, OUT)
    assert jnp.allclose(out_f32, ref, rtol=1e-5, atol=1e-4), "f32 path mismatch"

    print("KERNEL_OK")
</pallas_src>

<mosaic_0001>
module attributes {stable_mosaic.version = 11 : i64} {
  func.func @ada_linear_kernel(%arg0: i32, %arg1: i32, %arg2: i32, %arg3: memref<1x8x128xbf16, #tpu.memory_space<vmem>>, %arg4: memref<128x256xbf16, #tpu.memory_space<vmem>>, %arg5: memref<1x128xf32, #tpu.memory_space<vmem>>, %arg6: memref<2xf32, #tpu.memory_space<smem>>, %arg7: memref<2xf32, #tpu.memory_space<smem>>, %arg8: memref<1x8x128xf32, #tpu.memory_space<vmem>>) attributes {dimension_semantics = [#tpu.dimension_semantics<parallel>, #tpu.dimension_semantics<parallel>, #tpu.dimension_semantics<parallel>], iteration_bounds = array<i64: 1, 2, 1>, scalar_prefetch = 0 : i64, scratch_operands = 0 : i64, tpu.core_type = #tpu.core_type<tc>, window_params = [{transform_indices = @transform_0, window_bounds = array<i64: 1, 8, 128>}, {pipeline_mode = #tpu.pipeline_mode<synchronous>, transform_indices = @transform_1, window_bounds = array<i64: 128, 256>}, {transform_indices = @transform_2, window_bounds = array<i64: 1, 128>}, {transform_indices = @transform_3, window_bounds = array<i64: 2>}, {transform_indices = @transform_4, window_bounds = array<i64: 2>}, {transform_indices = @transform_5, window_bounds = array<i64: 1, 8, 128>}]} {
    %c1_i32 = arith.constant 1 : i32
    %0 = arith.muli %arg1, %c1_i32 : i32
    %c0 = arith.constant 0 : index
    %c0_0 = arith.constant 0 : index
    %c0_1 = arith.constant 0 : index
    %1 = vector.load %arg3[%c0, %c0_0, %c0_1] : memref<1x8x128xbf16, #tpu.memory_space<vmem>>, vector<1x8x128xbf16>
    %2 = vector.shape_cast %1 : vector<1x8x128xbf16> to vector<8x128xbf16>
    %c0_2 = arith.constant 0 : index
    %c0_3 = arith.constant 0 : index
    %3 = vector.load %arg4[%c0_2, %c0_3] : memref<128x256xbf16, #tpu.memory_space<vmem>>, vector<128x256xbf16>
    %cst = arith.constant dense<0.000000e+00> : vector<8x256xf32>
    %4 = tpu.matmul %2, %3, %cst {dimension_numbers = #tpu.dot_dimension_numbers<[1], [0], [0], [1], [0, 0, 1, 1], [], []>} : vector<8x128xbf16>, vector<128x256xbf16>, vector<8x256xf32> -> vector<8x256xf32>
    %c0_4 = arith.constant 0 : index
    %c0_5 = arith.constant 0 : index
    %5 = vector.load %arg5[%c0_4, %c0_5] : memref<1x128xf32, #tpu.memory_space<vmem>>, vector<1x128xf32>
    %c0_i32 = arith.constant 0 : i32
    %6 = arith.addi %0, %c0_i32 : i32
    %7 = arith.index_cast %6 : i32 to index
    %8 = memref.load %arg6[%7] : memref<2xf32, #tpu.memory_space<smem>>
    %c0_i32_6 = arith.constant 0 : i32
    %9 = arith.addi %0, %c0_i32_6 : i32
    %10 = arith.index_cast %9 : i32 to index
    %11 = memref.load %arg7[%10] : memref<2xf32, #tpu.memory_space<smem>>
    %12 = vector.extract_strided_slice %4 {offsets = [0, 0], sizes = [8, 128], strides = [1, 1]} : vector<8x256xf32> to vector<8x128xf32>
    %13 = vector.broadcast %8 : f32 to vector<8x128xf32>
    %14 = arith.mulf %13, %12 : vector<8x128xf32>
    %15 = vector.extract_strided_slice %4 {offsets = [0, 128], sizes = [8, 128], strides = [1, 1]} : vector<8x256xf32> to vector<8x128xf32>
    %16 = vector.broadcast %11 : f32 to vector<8x128xf32>
    %17 = arith.mulf %16, %15 : vector<8x128xf32>
    %18 = arith.addf %14, %17 : vector<8x128xf32>
    %cst_7 = arith.constant 1.000000e+00 : f32
    %19 = arith.addf %8, %cst_7 : f32
    %20 = vector.broadcast %19 : f32 to vector<1x128xf32>
    %21 = arith.mulf %5, %20 : vector<1x128xf32>
    %22 = vector.broadcast %11 : f32 to vector<1x128xf32>
    %23 = arith.addf %21, %22 : vector<1x128xf32>
    %24 = vector.broadcast %23 : vector<1x128xf32> to vector<8x128xf32>
    %25 = arith.addf %18, %24 : vector<8x128xf32>
    %c0_8 = arith.constant 0 : index
    %c0_9 = arith.constant 0 : index
    %c0_10 = arith.constant 0 : index
    %26 = vector.load %arg8[%c0_8, %c0_9, %c0_10] : memref<1x8x128xf32, #tpu.memory_space<vmem>>, vector<1x8x128xf32>
    %27 = vector.shape_cast %26 : vector<1x8x128xf32> to vector<8x128xf32>
    %28 = vector.shape_cast %25 : vector<8x128xf32> to vector<1x8x128xf32>
    tpu.vector_store %arg8[%c0_8, %c0_9, %c0_10], %28 {strides = array<i32>} : memref<1x8x128xf32, #tpu.memory_space<vmem>>, vector<1x8x128xf32>,
    return
  }
  func.func @transform_0(%arg0: i32, %arg1: i32, %arg2: i32) -> (i32, i32, i32) {
    %c0_i32 = arith.constant 0 : i32
    %c0_i32_0 = arith.constant 0 : i32
    return %arg1, %arg2, %c0_i32 : i32, i32, i32
  }
  func.func @transform_1(%arg0: i32, %arg1: i32, %arg2: i32) -> (i32, i32) {
    %c0_i32 = arith.constant 0 : i32
    %c0_i32_0 = arith.constant 0 : i32
    return %c0_i32, %arg0 : i32, i32
  }
  func.func @transform_2(%arg0: i32, %arg1: i32, %arg2: i32) -> (i32, i32) {
    %c0_i32 = arith.constant 0 : i32
    %c0_i32_0 = arith.constant 0 : i32
    return %c0_i32, %arg0 : i32, i32
  }
  func.func @transform_3(%arg0: i32, %arg1: i32, %arg2: i32) -> i32 {
    %c0_i32 = arith.constant 0 : i32
    %c0_i32_0 = arith.constant 0 : i32
    return %c0_i32 : i32
  }
  func.func @transform_4(%arg0: i32, %arg1: i32, %arg2: i32) -> i32 {
    %c0_i32 = arith.constant 0 : i32
    %c0_i32_0 = arith.constant 0 : i32
    return %c0_i32 : i32
  }
  func.func @transform_5(%arg0: i32, %arg1: i32, %arg2: i32) -> (i32, i32, i32) {
    %c0_i32 = arith.constant 0 : i32
    return %arg1, %arg2, %arg0 : i32, i32, i32
  }
}

module attributes {stable_mosaic.version = 11 : i64} {
  func.func @ada_linear_kernel(%arg0: i32, %arg1: i32, %arg2: i32, %arg3: memref<1x8x128xbf16, #tpu.memory_space<vmem>>, %arg4: memref<128x256xbf16, #tpu.memory_space<vmem>>, %arg5: memref<1x128xf32, #tpu.memory_space<vmem>>, %arg6: memref<2xf32, #tpu.memory_space<smem>>, %arg7: memref<2xf32, #tpu.memory_space<smem>>, %arg8: memref<1x8x128xf32, #tpu.memory_space<vmem>>) attributes {dimension_semantics = [#tpu.dimension_semantics<parallel>, #tpu.dimension_semantics<parallel>, #tpu.dimension_semantics<parallel>], iteration_bounds = array<i64: 1, 2, 1>, scalar_prefetch = 0 : i64, scratch_operands = 0 : i64, tpu.core_type = #tpu.core_type<tc>, window_params = [{transform_indices = @transform_0, window_bounds = array<i64: 1, 8, 128>}, {transform_indices = @transform_1, window_bounds = array<i64: 128, 256>}, {transform_indices = @transform_2, window_bounds = array<i64: 1, 128>}, {transform_indices = @transform_3, window_bounds = array<i64: 2>}, {transform_indices = @transform_4, window_bounds = array<i64: 2>}, {transform_indices = @transform_5, window_bounds = array<i64: 1, 8, 128>}]} {
    %c1_i32 = arith.constant 1 : i32
    %0 = arith.muli %arg1, %c1_i32 : i32
    %c0 = arith.constant 0 : index
    %c0_0 = arith.constant 0 : index
    %c0_1 = arith.constant 0 : index
    %1 = vector.load %arg3[%c0, %c0_0, %c0_1] : memref<1x8x128xbf16, #tpu.memory_space<vmem>>, vector<1x8x128xbf16>
    %2 = vector.shape_cast %1 : vector<1x8x128xbf16> to vector<8x128xbf16>
    %c0_2 = arith.constant 0 : index
    %c0_3 = arith.constant 0 : index
    %3 = vector.load %arg4[%c0_2, %c0_3] : memref<128x256xbf16, #tpu.memory_space<vmem>>, vector<128x256xbf16>
    %cst = arith.constant dense<0.000000e+00> : vector<8x256xf32>
    %4 = tpu.matmul %2, %3, %cst {dimension_numbers = #tpu.dot_dimension_numbers<[1], [0], [0], [1], [0, 0, 1, 1], [], []>} : vector<8x128xbf16>, vector<128x256xbf16>, vector<8x256xf32> -> vector<8x256xf32>
    %c0_4 = arith.constant 0 : index
    %c0_5 = arith.constant 0 : index
    %5 = vector.load %arg5[%c0_4, %c0_5] : memref<1x128xf32, #tpu.memory_space<vmem>>, vector<1x128xf32>
    %c0_i32 = arith.constant 0 : i32
    %6 = arith.addi %0, %c0_i32 : i32
    %7 = arith.index_cast %6 : i32 to index
    %8 = memref.load %arg6[%7] : memref<2xf32, #tpu.memory_space<smem>>
    %c0_i32_6 = arith.constant 0 : i32
    %9 = arith.addi %0, %c0_i32_6 : i32
    %10 = arith.index_cast %9 : i32 to index
    %11 = memref.load %arg7[%10] : memref<2xf32, #tpu.memory_space<smem>>
    %12 = vector.extract_strided_slice %4 {offsets = [0, 0], sizes = [8, 128], strides = [1, 1]} : vector<8x256xf32> to vector<8x128xf32>
    %13 = vector.broadcast %8 : f32 to vector<8x128xf32>
    %14 = arith.mulf %13, %12 : vector<8x128xf32>
    %15 = vector.extract_strided_slice %4 {offsets = [0, 128], sizes = [8, 128], strides = [1, 1]} : vector<8x256xf32> to vector<8x128xf32>
    %16 = vector.broadcast %11 : f32 to vector<8x128xf32>
    %17 = arith.mulf %16, %15 : vector<8x128xf32>
    %18 = arith.addf %14, %17 : vector<8x128xf32>
    %cst_7 = arith.constant 1.000000e+00 : f32
    %19 = arith.addf %8, %cst_7 : f32
    %20 = vector.broadcast %19 : f32 to vector<1x128xf32>
    %21 = arith.mulf %5, %20 : vector<1x128xf32>
    %22 = vector.broadcast %11 : f32 to vector<1x128xf32>
    %23 = arith.addf %21, %22 : vector<1x128xf32>
    %24 = vector.broadcast %23 : vector<1x128xf32> to vector<8x128xf32>
    %25 = arith.addf %18, %24 : vector<8x128xf32>
    %c0_8 = arith.constant 0 : index
    %c0_9 = arith.constant 0 : index
    %c0_10 = arith.constant 0 : index
    %26 = vector.load %arg8[%c0_8, %c0_9, %c0_10] : memref<1x8x128xf32, #tpu.memory_space<vmem>>, vector<1x8x128xf32>
    %27 = vector.shape_cast %26 : vector<1x8x128xf32> to vector<8x128xf32>
    %28 = vector.shape_cast %25 : vector<8x128xf32> to vector<1x8x128xf32>
    tpu.vector_store %arg8[%c0_8, %c0_9, %c0_10], %28 {strides = array<i32>} : memref<1x8x128xf32, #tpu.memory_space<vmem>>, vector<1x8x128xf32>,
    return
  }
  func.func @transform_0(%arg0: i32, %arg1: i32, %arg2: i32) -> (i32, i32, i32) {
    %c0_i32 = arith.constant 0 : i32
    %c0_i32_0 = arith.constant 0 : i32
    return %arg1, %arg2, %c0_i32 : i32, i32, i32
  }
  func.func @transform_1(%arg0: i32, %arg1: i32, %arg2: i32) -> (i32, i32) {
    %c0_i32 = arith.constant 0 : i32
    %c0_i32_0 = arith.constant 0 : i32
    return %c0_i32, %arg0 : i32, i32
  }
  func.func @transform_2(%arg0: i32, %arg1: i32, %arg2: i32) -> (i32, i32) {
    %c0_i32 = arith.constant 0 : i32
    %c0_i32_0 = arith.constant 0 : i32
    return %c0_i32, %arg0 : i32, i32
  }
  func.func @transform_3(%arg0: i32, %arg1: i32, %arg2: i32) -> i32 {
    %c0_i32 = arith.constant 0 : i32
    %c0_i32_0 = arith.constant 0 : i32
    return %c0_i32 : i32
  }
  func.func @transform_4(%arg0: i32, %arg1: i32, %arg2: i32) -> i32 {
    %c0_i32 = arith.constant 0 : i32
    %c0_i32_0 = arith.constant 0 : i32
    return %c0_i32 : i32
  }
  func.func @transform_5(%arg0: i32, %arg1: i32, %arg2: i32) -> (i32, i32, i32) {
    %c0_i32 = arith.constant 0 : i32
    return %arg1, %arg2, %arg0 : i32, i32, i32
  }
}

</mosaic_0001>

<llo_original>
// kernel: tpu_custom_call.1
$region0: #{tpu_custom_call.1}
  #allocation0 [shape = 'u32[]', space=smem, size = 0x4, offset = 0x4, fixed_abs, tag = 'smem constant byte address 0x4 - core index']
  #allocation1 [shape = 'u32[144,128]{1,0:T(1,128)}', space=vmem, size = 0x12000, scoped, tag = 'internal scratch']
  %s0 = inlined_call_operand.hbm [shape: bf16[2,8,128], index: 0, kind: input, shape index: {}]
  %s1 = inlined_call_operand.hbm [shape: bf16[128,256], index: 1, kind: input, shape index: {}]
  %s2 = inlined_call_operand.vmem [shape: f32[1,128], index: 2, kind: input, shape index: {}]
  %s3 = inlined_call_operand.vmem [shape: f32[2], index: 3, kind: input, shape index: {}]
  %s4 = inlined_call_operand.vmem [shape: f32[2], index: 4, kind: input, shape index: {}]
  %s5 = inlined_call_operand.hbm [shape: f32[2,8,128], index: 5, kind: output, shape index: {}]
  %s6 = sld [smem:[#allocation0]]
  $region69: #{tpu_custom_call.1} parent=0
    _
  %s8 = ssub.s32 1, %s6
  %s9 = scalar_select 0, %s8, %s6
  $region1: #{tpu_custom_call.1} parent=0
    #allocation2 [shape = 'u8[4096]{0}', space=vmem, size = 0x1000, scoped, tag = 'input window, operand 0']
    #allocation3 [shape = 's32[2]{0}', space=sflag, size = 0x8, scoped, tag = 'scoped memory for tpu_custom_call.1']
    #allocation4 [shape = 's32[2]{0}', space=sflag, size = 0x8, scoped, tag = 'scoped memory for tpu_custom_call.1']
    #allocation5 [shape = 's32[2]{0}', space=sflag, size = 0x8, scoped, tag = 'scoped memory for tpu_custom_call.1']
    #allocation6 [shape = 'u8[65536]{0}', space=vmem, size = 0x10000, scoped, tag = 'input window, operand 1, single buffered']
    #allocation7 [shape = 's32[1]{0}', space=sflag, size = 0x4, scoped, tag = 'scoped memory for tpu_custom_call.1']
    #allocation8 [shape = 'u8[512]{0}', space=smem, size = 0x200, scoped, tag = 'input window, operand 3, single buffered']
    #allocation9 [shape = 'u8[512]{0}', space=smem, size = 0x200, scoped, tag = 'input window, operand 4, single buffered']
    #allocation10 [shape = 's32[1]{0}', space=sflag, size = 0x4, scoped, tag = 'scoped memory for tpu_custom_call.1']
    #allocation11 [shape = 'u8[8192]{0}', space=vmem, size = 0x2000, scoped, tag = 'output window, operand 0']
    %10 = vsyncpa [#allocation3], 0
    %s11 = scalar_lea.sflag [#allocation3], 1
    %12 = vsyncpa %s11, 0
    %13 = vsyncpa [#allocation7], 0
    %14 = vsyncpa [#allocation5], 0
    %15 = vsyncpa [#allocation10], 0
    %16 = vsyncpa [#allocation4], 0
    %s17 = scalar_lea.sflag [#allocation4], 1
    %18 = vsyncpa %s17, 0
    loop: start=0, step=1, limit=4
    $region2: #{tpu_custom_call.1} parent=1 // loop_pre_header
      _
    $region3: #{tpu_custom_call.1} parent=1 // loop_header
      %s20 = sphi 0, %s24
      %p21 = scmp.ge.s32.totalorder %s20, 4
      %s27 = sphi 0, %s46
      %s28 = sphi 0, %s42
      %s29 = sphi 0, %s38
      %s30 = sphi 0, %s27
      %s31 = sphi 0, %s28
      %s32 = sphi 0, %s29
      %s33 = sphi 0, %s30
      %s34 = sphi 0, %s31
      %s35 = sphi 0, %s32
      %s51 = sphi 0, %s53
      %s54 = sphi 0, %s51
      %s55 = sphi 0, %s54
      %s71 = sphi 0, %s55
      %s77 = sphi 0, %s79
      %s80 = sphi 0, %s77
      %s81 = sphi 0, %s80
      %s97 = sphi 0, %s81
      %s103 = sphi 0, %s105
      %s106 = sphi 0, %s103
      %s107 = sphi 0, %s106
      %s123 = sphi 0, %s107
      %s127 = sphi 0, %s127
      %s129 = sphi 0, %s127
      %s130 = sphi 0, %s129
      %s144 = sphi 0, %s130
      %s148 = sphi 0, %s148
      %s150 = sphi 0, %s148
      %s151 = sphi 0, %s150
      %s165 = sphi 0, %s151
      %s175 = sphi 0, %s177
      %s178 = sphi 0, %s175
      %s179 = sphi 0, %s178
      %s195 = sphi 0, %s179
    $region4: #{tpu_custom_call.1} parent=1 // loop_header_branch
      %23 = sbr.rel (%p21) target = $region8
    $region5: #{tpu_custom_call.1} parent=1 // loop_body
      %s25 = ssub.s32 %s20, 1
      %s26 = ssub.s32 %s20, 2
      %s36 = sadd.s32 1, %s29
      %p37 = scmp.ge.s32.totalorder %s36, 1
      %s38 = scalar_select %p37, 0, %s36
      %s39 = sadd.s32 1, %s28
      %s40 = scalar_select %p37, %s39, %s28
      %p41 = scmp.ge.s32.totalorder %s40, 2
      %s42 = scalar_select %p41, 0, %s40
      %s43 = sadd.s32 1, %s27
      %s44 = scalar_select %p41, %s43, %s27
      %p45 = scmp.ge.s32.totalorder %s44, 1
      %s46 = scalar_select %p45, 0, %s44
      %s47 = ssub.s32 %s28, %s42
      %s48 = ssub.s32 %s29, %s38
      %s49 = sor.u32 %s47, %s48
      %p50 = scmp.eq.s32.totalorder %s49, 0
      %s52 = sadd.s32 %s51, 1
      %s53 = scalar_select %p50, %s51, %s52
      %p56 = pneg %p50
      %p57 = scmp.eq.s32.totalorder %s20, 1
      %p58 = por %p56, %p57
      %p59 = scmp.ne.s32.totalorder %s51, %s54
      %p60 = scmp.eq.s32.totalorder %s20, 0
      %p61 = por %p59, %p60
      %p62 = scmp.ne.s32.totalorder %s51, %s54
      %p63 = scmp.eq.s32.totalorder %s25, 1
      %p64 = por %p62, %p63
      %p65 = scmp.ne.s32.totalorder %s54, %s55
      %p66 = scmp.eq.s32.totalorder %s25, 0
      %p67 = por %p65, %p66
      %p68 = scmp.ne.s32.totalorder %s54, %s55
      %p69 = scmp.eq.s32.totalorder %s26, 1
      %p70 = por %p68, %p69
      %p72 = scmp.ne.s32.totalorder %s55, %s71
      %p73 = scmp.eq.s32.totalorder %s26, 0
      %p74 = por %p72, %p73
      %s75 = ssub.s32 %s27, %s46
      %p76 = scmp.eq.s32.totalorder %s75, 0
      %s78 = sadd.s32 %s77, 1
      %s79 = scalar_select %p76, %s77, %s78
      %p82 = pneg %p76
      %p83 = scmp.eq.s32.totalorder %s20, 1
      %p84 = por %p82, %p83
      %p85 = scmp.ne.s32.totalorder %s77, %s80
      %p86 = scmp.eq.s32.totalorder %s20, 0
      %p87 = por %p85, %p86
      %p88 = scmp.ne.s32.totalorder %s77, %s80
      %p89 = scmp.eq.s32.totalorder %s25, 1
      %p90 = por %p88, %p89
      %p91 = scmp.ne.s32.totalorder %s80, %s81
      %p92 = scmp.eq.s32.totalorder %s25, 0
      %p93 = por %p91, %p92
      %p94 = scmp.ne.s32.totalorder %s80, %s81
      %p95 = scmp.eq.s32.totalorder %s26, 1
      %p96 = por %p94, %p95
      %p98 = scmp.ne.s32.totalorder %s81, %s97
      %p99 = scmp.eq.s32.totalorder %s26, 0
      %p100 = por %p98, %p99
      %s101 = ssub.s32 %s27, %s46
      %p102 = scmp.eq.s32.totalorder %s101, 0
      %s104 = sadd.s32 %s103, 1
      %s105 = scalar_select %p102, %s103, %s104
      %p108 = pneg %p102
      %p109 = scmp.eq.s32.totalorder %s20, 1
      %p110 = por %p108, %p109
      %p111 = scmp.ne.s32.totalorder %s103, %s106
      %p112 = scmp.eq.s32.totalorder %s20, 0
      %p113 = por %p111, %p112
      %p114 = scmp.ne.s32.totalorder %s103, %s106
      %p115 = scmp.eq.s32.totalorder %s25, 1
      %p116 = por %p114, %p115
      %p117 = scmp.ne.s32.totalorder %s106, %s107
      %p118 = scmp.eq.s32.totalorder %s25, 0
      %p119 = por %p117, %p118
      %p120 = scmp.ne.s32.totalorder %s106, %s107
      %p121 = scmp.eq.s32.totalorder %s26, 1
      %p122 = por %p120, %p121
      %p124 = scmp.ne.s32.totalorder %s107, %s123
      %p125 = scmp.eq.s32.totalorder %s26, 0
      %p126 = por %p124, %p125
      %s128 = sadd.s32 %s127, 1
      %p131 = scmp.eq.s32.totalorder %s20, 1
      %p132 = scmp.ne.s32.totalorder %s127, %s129
      %p133 = scmp.eq.s32.totalorder %s20, 0
      %p134 = por %p132, %p133
      %p135 = scmp.ne.s32.totalorder %s127, %s129
      %p136 = scmp.eq.s32.totalorder %s25, 1
      %p137 = por %p135, %p136
      %p138 = scmp.ne.s32.totalorder %s129, %s130
      %p139 = scmp.eq.s32.totalorder %s25, 0
      %p140 = por %p138, %p139
      %p141 = scmp.ne.s32.totalorder %s129, %s130
      %p142 = scmp.eq.s32.totalorder %s26, 1
      %p143 = por %p141, %p142
      %p145 = scmp.ne.s32.totalorder %s130, %s144
      %p146 = scmp.eq.s32.totalorder %s26, 0
      %p147 = por %p145, %p146
      %s149 = sadd.s32 %s148, 1
      %p152 = scmp.eq.s32.totalorder %s20, 1
      %p153 = scmp.ne.s32.totalorder %s148, %s150
      %p154 = scmp.eq.s32.totalorder %s20, 0
      %p155 = por %p153, %p154
      %p156 = scmp.ne.s32.totalorder %s148, %s150
      %p157 = scmp.eq.s32.totalorder %s25, 1
      %p158 = por %p156, %p157
      %p159 = scmp.ne.s32.totalorder %s150, %s151
      %p160 = scmp.eq.s32.totalorder %s25, 0
      %p161 = por %p159, %p160
      %p162 = scmp.ne.s32.totalorder %s150, %s151
      %p163 = scmp.eq.s32.totalorder %s26, 1
      %p164 = por %p162, %p163
      %p166 = scmp.ne.s32.totalorder %s151, %s165
      %p167 = scmp.eq.s32.totalorder %s26, 0
      %p168 = por %p166, %p167
      %s169 = ssub.s32 %s28, %s42
      %s170 = ssub.s32 %s29, %s38
      %s171 = sor.u32 %s169, %s170
      %s172 = ssub.s32 %s27, %s46
      %s173 = sor.u32 %s171, %s172
      %p174 = scmp.eq.s32.totalorder %s173, 0
      %s176 = sadd.s32 %s175, 1
      %s177 = scalar_select %p174, %s175, %s176
      %p180 = pneg %p174
      %p181 = scmp.eq.s32.totalorder %s20, 1
      %p182 = por %p180, %p181
      %p183 = scmp.ne.s32.totalorder %s175, %s178
      %p184 = scmp.eq.s32.totalorder %s20, 0
      %p185 = por %p183, %p184
      %p186 = scmp.ne.s32.totalorder %s175, %s178
      %p187 = scmp.eq.s32.totalorder %s25, 1
      %p188 = por %p186, %p187
      %p189 = scmp.ne.s32.totalorder %s178, %s179
      %p190 = scmp.eq.s32.totalorder %s25, 0
      %p191 = por %p189, %p190
      %p192 = scmp.ne.s32.totalorder %s178, %s179
      %p193 = scmp.eq.s32.totalorder %s26, 1
      %p194 = por %p192, %p193
      %p196 = scmp.ne.s32.totalorder %s179, %s195
      %p197 = scmp.eq.s32.totalorder %s26, 0
      %p198 = por %p196, %p197
      %p199 = scmp.le.s32.totalorder 1, %s20
      %p200 = scmp.lt.s32.totalorder %s20, 3
      %p201 = pnand %p199, %p200
      %p202 = pneg %p201
      // Predicated region
      $region9: #{tpu_custom_call.1} parent=5 // pred_check
        _
      $region10: #{tpu_custom_call.1} parent=5 // pred_check_branch
        %204 = sbr.rel (%p201) target = $region12
      $region11: #{tpu_custom_call.1} parent=5 // pred_region
        %s205 = ssub.s32 %s20, 1
        // Predicated region
        $region13: #{tpu_custom_call.1} parent=11 // pred_check
          %p206 = pneg %p93
        $region14: #{tpu_custom_call.1} parent=11 // pred_check_branch
          %208 = sbr.rel (%p206) target = $region16
        $region15: #{tpu_custom_call.1} parent=11 // pred_region
          %s209 = smul.u32 2, %s30
          %s211 = ssub.s32 2048, 2048
          %212 = vsyncadd [#allocation7], %s211
          %s213 = smul.addr %s209, 64
          %s214 = scalar_lea.hbm %s1, %s213
          %s215 = sshll.u32 [#allocation6], 4
          %s216 = int_to_ptr.vmem [resolvable:$true] %s215
          %221 = dma.hbm_to_vmem [thread:$0]  %s214, 2048, %s216, [#allocation7], 128, 128, 8
        $region16: #{tpu_custom_call.1} parent=11 // pred_fallthru
          _
        // Predicated region
        $region17: #{tpu_custom_call.1} parent=11 // pred_check
          %p222 = pneg %p119
        $region18: #{tpu_custom_call.1} parent=11 // pred_check_branch
          %224 = sbr.rel (%p222) target = $region20
        $region19: #{tpu_custom_call.1} parent=11 // pred_region
          %p225 = scmp.lt.s32.totalorder %s30, 0
          %s226 = scalar_select %p225, %s30, 0
          %s227 = scalar_lea.vmem %s2, %s226
        $region20: #{tpu_custom_call.1} parent=11 // pred_fallthru
          _
        // Predicated region
        $region21: #{tpu_custom_call.1} parent=11 // pred_check
          %p228 = pneg %p140
        $region22: #{tpu_custom_call.1} parent=11 // pred_check_branch
          %230 = sbr.rel (%p228) target = $region24
        $region23: #{tpu_custom_call.1} parent=11 // pred_region
          %s232 = ssub.s32 16, 16
          %233 = vsyncadd [#allocation5], %s232
          %s235 = sshll.u32 %s3, 4
          %s236 = int_to_ptr.vmem [resolvable:$true] %s235
          %238 = dma.vmem_to_smem %s236, 16, [#allocation8], [#allocation5]
        $region24: #{tpu_custom_call.1} parent=11 // pred_fallthru
          _
        // Predicated region
        $region25: #{tpu_custom_call.1} parent=11 // pred_check
          %p239 = pneg %p161
        $region26: #{tpu_custom_call.1} parent=11 // pred_check_branch
          %241 = sbr.rel (%p239) target = $region28
        $region27: #{tpu_custom_call.1} parent=11 // pred_region
          %s243 = ssub.s32 16, 16
          %244 = vsyncadd [#allocation10], %s243
          %s246 = sshll.u32 %s4, 4
          %s247 = int_to_ptr.vmem [resolvable:$true] %s246
          %249 = dma.vmem_to_smem %s247, 16, [#allocation9], [#allocation10]
        $region28: #{tpu_custom_call.1} parent=11 // pred_fallthru
          _
      $region12: #{tpu_custom_call.1} parent=5 // pred_fallthru
        _
      %p250 = scmp.lt.s32.totalorder %s20, 2
      // Predicated region
      $region29: #{tpu_custom_call.1} parent=5 // pred_check
        %p251 = pneg %p250
      $region30: #{tpu_custom_call.1} parent=5 // pred_check_branch
        %253 = sbr.rel (%p251) target = $region32
      $region31: #{tpu_custom_call.1} parent=5 // pred_region
        // Predicated region
        $region33: #{tpu_custom_call.1} parent=31 // pred_check
          %p254 = pneg %p61
        $region34: #{tpu_custom_call.1} parent=31 // pred_check_branch
          %256 = sbr.rel (%p254) target = $region36
        $region35: #{tpu_custom_call.1} parent=31 // pred_region
          %s257 = sand.u32 %s51, 1
          %s258 = scalar_lea.sflag [#allocation3], %s257
          %s259 = sand.u32 %s51, 1
          %s260 = smul.addr %s259, 4
          %s261 = scalar_lea.vmem [#allocation2], %s260
          %s263 = ssub.s32 64, 64
          %264 = vsyncadd %s258, %s263
          %s265 = sadd.s32 %s29, %s28
          %s266 = smul.addr %s265, 64
          %s267 = scalar_lea.hbm %s0, %s266
          %s269 = sshll.u32 %s261, 4
          %s270 = int_to_ptr.vmem [resolvable:$true] %s269
          %272 = dma.hbm_to_vmem [thread:$0]  %s267, 64, %s270, %s258
        $region36: #{tpu_custom_call.1} parent=31 // pred_fallthru
          _
      $region32: #{tpu_custom_call.1} parent=5 // pred_fallthru
        _
      %p273 = scmp.le.s32.totalorder 1, %s20
      %p274 = scmp.lt.s32.totalorder %s20, 3
      %p275 = pnand %p273, %p274
      %p276 = pneg %p275
      // Predicated region
      $region37: #{tpu_custom_call.1} parent=5 // pred_check
        _
      $region38: #{tpu_custom_call.1} parent=5 // pred_check_branch
        %278 = sbr.rel (%p275) target = $region40
      $region39: #{tpu_custom_call.1} parent=5 // pred_region
        %s279 = ssub.s32 %s20, 1
        %s280 = sand.u32 %s54, 1
        %s281 = scalar_lea.sflag [#allocation3], %s280
        %s282 = sand.u32 %s54, 1
        %s283 = smul.addr %s282, 4
        %s284 = scalar_lea.vmem [#allocation2], %s283
        // Predicated region
        $region41: #{tpu_custom_call.1} parent=39 // pred_check
          %p285 = pneg %p67
        $region42: #{tpu_custom_call.1} parent=39 // pred_check_branch
          %287 = sbr.rel (%p285) target = $region44
        $region43: #{tpu_custom_call.1} parent=39 // pred_region
          %288 = dma.done %s281, 64
        $region44: #{tpu_custom_call.1} parent=39 // pred_fallthru
          _
        // Predicated region
        $region45: #{tpu_custom_call.1} parent=39 // pred_check
          %p289 = pneg %p93
        $region46: #{tpu_custom_call.1} parent=39 // pred_check_branch
          %291 = sbr.rel (%p289) target = $region48
        $region47: #{tpu_custom_call.1} parent=39 // pred_region
          %292 = dma.done [#allocation7], 2048
        $region48: #{tpu_custom_call.1} parent=39 // pred_fallthru
          _
        // Predicated region
        $region49: #{tpu_custom_call.1} parent=39 // pred_check
          %p293 = pneg %p140
        $region50: #{tpu_custom_call.1} parent=39 // pred_check_branch
          %295 = sbr.rel (%p293) target = $region52
        $region51: #{tpu_custom_call.1} parent=39 // pred_region
          %296 = dma.done [#allocation5], 16
        $region52: #{tpu_custom_call.1} parent=39 // pred_fallthru
          _
        // Predicated region
        $region53: #{tpu_custom_call.1} parent=39 // pred_check
          %p297 = pneg %p161
        $region54: #{tpu_custom_call.1} parent=39 // pred_check_branch
          %299 = sbr.rel (%p297) target = $region56
        $region55: #{tpu_custom_call.1} parent=39 // pred_region
          %300 = dma.done [#allocation10], 16
        $region56: #{tpu_custom_call.1} parent=39 // pred_fallthru
          _
        %301 = sfence
        %s302 = sand.u32 %s54, 1
        %s303 = scalar_lea.sflag [#allocation3], %s302
        %s304 = sand.u32 %s54, 1
        %s305 = smul.addr %s304, 4
        %s306 = scalar_lea.vmem [#allocation2], %s305
        %p307 = pneg %p67
        %p308 = pneg %p64
        %p309 = pneg %p93
        %p310 = pneg %p90
        %p311 = scmp.lt.s32.totalorder %s30, 0
        %s312 = scalar_select %p311, %s30, 0
        %s313 = scalar_lea.vmem %s2, %s312
        %p314 = pneg %p119
        %p315 = pneg %p116
        %p316 = pneg %p140
        %p317 = pneg %p137
        %p318 = pneg %p161
        %p319 = pneg %p158
        %p320 = pneg %p191
        %p321 = pneg %p188
        %s322 = sand.u32 %s178, 1
        %s323 = scalar_lea.sflag [#allocation4], %s322
        %s324 = sand.u32 %s178, 1
        %s325 = smul.addr %s324, 8
        %s326 = scalar_lea.vmem [#allocation11], %s325
        %s327 = smul.u32 2, %s30
        %p328 = scmp.lt.s32.totalorder %s30, 0
        %s329 = scalar_select %p328, %s30, 0
        %s330 = scalar_lea.vmem %s2, %s329
        %v332 = vld [vmem:[%s284] sm:$0xf]
        %v333 = vld [vmem:[#allocation6] sm:$0xff]
        %v334 = vld [vmem:[#allocation6 + $0x8] sm:$0xff]
        %v335 = vld [vmem:[#allocation6 + $0x10] sm:$0xff]
        %v336 = vld [vmem:[#allocation6 + $0x18] sm:$0xff]
        %v337 = vld [vmem:[#allocation6 + $0x20] sm:$0xff]
        %v338 = vld [vmem:[#allocation6 + $0x28] sm:$0xff]
        %v339 = vld [vmem:[#allocation6 + $0x30] sm:$0xff]
        %v340 = vld [vmem:[#allocation6 + $0x38] sm:$0xff]
        %v341 = vld [vmem:[#allocation6 + $0x40] sm:$0xff]
        %v342 = vld [vmem:[#allocation6 + $0x48] sm:$0xff]
        %v343 = vld [vmem:[#allocation6 + $0x50] sm:$0xff]
        %v344 = vld [vmem:[#allocation6 + $0x58] sm:$0xff]
        %v345 = vld [vmem:[#allocation6 + $0x60] sm:$0xff]
        %v346 = vld [vmem:[#allocation6 + $0x68] sm:$0xff]
        %v347 = vld [vmem:[#allocation6 + $0x70] sm:$0xff]
        %v348 = vld [vmem:[#allocation6 + $0x78] sm:$0xff]
        %v365 = vunpack.c.l.b16 %v333
        %v366 = vunpack.c.h.b16 %v333
        %v367 = vunpack.c.l.b16 %v334
        %v368 = vunpack.c.h.b16 %v334
        %v369 = vunpack.c.l.b16 %v335
        %v370 = vunpack.c.h.b16 %v335
        %v371 = vunpack.c.l.b16 %v336
        %v372 = vunpack.c.h.b16 %v336
        %v373 = vunpack.c.l.b16 %v337
        %v374 = vunpack.c.h.b16 %v337
        %v375 = vunpack.c.l.b16 %v338
        %v376 = vunpack.c.h.b16 %v338
        %v377 = vunpack.c.l.b16 %v339
        %v378 = vunpack.c.h.b16 %v339
        %v379 = vunpack.c.l.b16 %v340
        %v380 = vunpack.c.h.b16 %v340
        %v381 = vunpack.c.l.b16 %v341
        %v382 = vunpack.c.h.b16 %v341
        %v383 = vunpack.c.l.b16 %v342
        %v384 = vunpack.c.h.b16 %v342
        %v385 = vunpack.c.l.b16 %v343
        %v386 = vunpack.c.h.b16 %v343
        %v387 = vunpack.c.l.b16 %v344
        %v388 = vunpack.c.h.b16 %v344
        %v389 = vunpack.c.l.b16 %v345
        %v390 = vunpack.c.h.b16 %v345
        %v391 = vunpack.c.l.b16 %v346
        %v392 = vunpack.c.h.b16 %v346
        %v393 = vunpack.c.l.b16 %v347
        %v394 = vunpack.c.h.b16 %v347
        %v395 = vunpack.c.l.b16 %v348
        %v396 = vunpack.c.h.b16 %v348
        %v397 = vpack.c.b16 %v367, %v365
        %v398 = vpack.c.b16 %v368, %v366
        %v399 = vpack.c.b16 %v371, %v369
        %v400 = vpack.c.b16 %v372, %v370
        %v401 = vpack.c.b16 %v375, %v373
        %v402 = vpack.c.b16 %v376, %v374
        %v403 = vpack.c.b16 %v379, %v377
        %v404 = vpack.c.b16 %v380, %v378
        %v405 = vpack.c.b16 %v383, %v381
        %v406 = vpack.c.b16 %v384, %v382
        %v407 = vpack.c.b16 %v387, %v385
        %v408 = vpack.c.b16 %v388, %v386
        %v409 = vpack.c.b16 %v391, %v389
        %v410 = vpack.c.b16 %v392, %v390
        %v411 = vpack.c.b16 %v395, %v393
        %v412 = vpack.c.b16 %v396, %v394
        %429 = vmatprep.subr.bf16.mxu0 %v412
        %430 = vmatpush1.bf16.msra.mxu0 %v411
        %431 = vmatprep.subr.bf16.mxu0 %v410
        %432 = vmatpush1.bf16.msra.mxu0 %v409
        %433 = vmatprep.subr.bf16.mxu0 %v408
        %434 = vmatpush1.bf16.msra.mxu0 %v407
        %435 = vmatprep.subr.bf16.mxu0 %v406
        %436 = vmatpush1.bf16.msra.mxu0 %v405
        %437 = vmatprep.subr.bf16.mxu0 %v404
        %438 = vmatpush1.bf16.msra.mxu0 %v403
        %439 = vmatprep.subr.bf16.mxu0 %v402
        %440 = vmatpush1.bf16.msra.mxu0 %v401
        %441 = vmatprep.subr.bf16.mxu0 %v400
        %442 = vmatpush1.bf16.msra.mxu0 %v399
        %443 = vmatprep.subr.bf16.mxu0 %v398
        %444 = vmatpush1.bf16.msra.mxu0 %v397
        %445 = vmatprep.subr.bf16.mxu0 0
        %446 = vmatpush2.bf16.msra.mxu0 0
        %447 = vmatprep.subr.bf16.mxu0 0
        %448 = vmatpush2.bf16.msra.mxu0 0
        %449 = vmatprep.subr.bf16.mxu0 0
        %450 = vmatpush2.bf16.msra.mxu0 0
        %451 = vmatprep.subr.bf16.mxu0 0
        %452 = vmatpush2.bf16.msra.mxu0 0
        %453 = vmatprep.subr.bf16.mxu0 0
        %454 = vmatpush2.bf16.msra.mxu0 0
        %455 = vmatprep.subr.bf16.mxu0 0
        %456 = vmatpush2.bf16.msra.mxu0 0
        %457 = vmatprep.subr.bf16.mxu0 0
        %458 = vmatpush2.bf16.msra.mxu0 0
        %459 = vmatprep.subr.bf16.mxu0 0
        %460 = vmatpush2.bf16.msra.mxu0 0
        %461 = vmatprep.mubr.bf16.mxu0 0
        %462 = vmatmul.mubr.bf16.gmra.mxu0 %v332
        %v463 = vpop.f32.mrf.mxu0
        %v464 = vadd.f32 0.0, %v463
        %v465 = vpop.f32.mrf.mxu0
        %v466 = vadd.f32 0.0, %v465
        %v467 = vpop.f32.mrf.mxu0
        %v468 = vpop.f32.mrf.mxu0
        %469 = vdwg.mxu0
        %v470 = vld [vmem:[%s330] sm:$0x1]
        %s471 = sld [smem:[#allocation8 + %s31]]
        %s472 = sld [smem:[#allocation9 + %s31]]
        %v473 = vstv %s471
        %v474 = vmul.f32 %v473, %v464
        %v475 = vstv %s472
        %v476 = vmul.f32 %v475, %v466
        %v477 = vadd.f32 %v474, %v476
        %s478 = sadd.f32 %s471, 1.0
        %v479 = vstv %s478
        %v480 = vmul.f32 %v470, %v479
        %v481 = vadd.f32 %v480, %v475
        %v483 = vlaneseq
        %v484 = vshrl.u32 %v483, 7
        %v485 = vsub.s32 0, %v484
        %v486 = vrot.slane %v481, %v485
        %v488 = vadd.f32 %v477, %v486
        %489 = vst [vmem:[%s326] sm:$0xff] %v488
        %s490 = sand.u32 %s178, 1
        %s491 = scalar_lea.sflag [#allocation4], %s490
        %s492 = sand.u32 %s178, 1
        %s493 = smul.addr %s492, 8
        %s494 = scalar_lea.vmem [#allocation11], %s493
        // Predicated region
        $region57: #{tpu_custom_call.1} parent=39 // pred_check
          %p495 = pneg %p188
        $region58: #{tpu_custom_call.1} parent=39 // pred_check_branch
          %497 = sbr.rel (%p495) target = $region60
        $region59: #{tpu_custom_call.1} parent=39 // pred_region
          %s499 = ssub.s32 128, 128
          %500 = vsyncadd %s491, %s499
          %s501 = sadd.s32 %s30, %s32
          %s502 = sadd.s32 %s501, %s31
          %s503 = smul.addr %s502, 128
          %s504 = scalar_lea.hbm %s5, %s503
          %s506 = sshll.u32 %s494, 4
          %s507 = int_to_ptr.vmem [resolvable:$true] %s506
          %509 = dma.vmem_to_hbm [thread:$0]  %s507, 128, %s504, %s491
        $region60: #{tpu_custom_call.1} parent=39 // pred_fallthru
          _
      $region40: #{tpu_custom_call.1} parent=5 // pred_fallthru
        _
      %p510 = scmp.le.s32.totalorder 2, %s20
      // Predicated region
      $region61: #{tpu_custom_call.1} parent=5 // pred_check
        %p511 = pneg %p510
      $region62: #{tpu_custom_call.1} parent=5 // pred_check_branch
        %513 = sbr.rel (%p511) target = $region64
      $region63: #{tpu_custom_call.1} parent=5 // pred_region
        %s514 = ssub.s32 %s20, 2
        // Predicated region
        $region65: #{tpu_custom_call.1} parent=63 // pred_check
          %p515 = pneg %p194
        $region66: #{tpu_custom_call.1} parent=63 // pred_check_branch
          %517 = sbr.rel (%p515) target = $region68
        $region67: #{tpu_custom_call.1} parent=63 // pred_region
          %s518 = sand.u32 %s179, 1
          %s519 = scalar_lea.sflag [#allocation4], %s518
          %s520 = sand.u32 %s179, 1
          %s521 = smul.addr %s520, 8
          %s522 = scalar_lea.vmem [#allocation11], %s521
          %523 = dma.done %s519, 128
        $region68: #{tpu_custom_call.1} parent=63 // pred_fallthru
          _
      $region64: #{tpu_custom_call.1} parent=5 // pred_fallthru
        _
    $region6: #{tpu_custom_call.1} parent=1 // loop_footer
      %s24 = sadd.s32 1, %s20
    $region7: #{tpu_custom_call.1} parent=1 // loop_footer_branch
      %19 = sbr.rel target = $region3
    $region8: #{tpu_custom_call.1} parent=1 // loop_exit
      _
    %524 = vsyncpa [#allocation3], 1
    %s525 = scalar_lea.sflag [#allocation3], 1
    %526 = vsyncpa %s525, 1
    %527 = vsyncpa [#allocation7], 1
    %528 = vsyncpa [#allocation4], 1
    %s529 = scalar_lea.sflag [#allocation4], 1
    %530 = vsyncpa %s529, 1
    %531 = vsyncpa [#allocation5], 1
    %s532 = scalar_lea.sflag [#allocation5], 1
    %533 = vsyncpa %s532, 1
    %534 = vsyncpa [#allocation10], 1

// kernel: tpu_custom_call.1
$region0: #{tpu_custom_call.1}
  #allocation0 [shape = 'u32[]', space=smem, size = 0x4, offset = 0x4, fixed_abs, tag = 'smem constant byte address 0x4 - core index']
  #allocation1 [shape = 'u32[144,128]{1,0:T(1,128)}', space=vmem, size = 0x12000, scoped, tag = 'internal scratch']
  %s0 = inlined_call_operand.hbm [shape: bf16[2,8,128], index: 0, kind: input, shape index: {}]
  %s1 = inlined_call_operand.hbm [shape: bf16[128,256], index: 1, kind: input, shape index: {}]
  %s2 = inlined_call_operand.vmem [shape: f32[1,128], index: 2, kind: input, shape index: {}]
  %s3 = inlined_call_operand.vmem [shape: f32[2], index: 3, kind: input, shape index: {}]
  %s4 = inlined_call_operand.vmem [shape: f32[2], index: 4, kind: input, shape index: {}]
  %s5 = inlined_call_operand.hbm [shape: f32[2,8,128], index: 5, kind: output, shape index: {}]
  %s6 = sld [smem:[#allocation0]]
  $region69: #{tpu_custom_call.1} parent=0
    _
  %s8 = ssub.s32 1, %s6
  %s9 = scalar_select 0, %s8, %s6
  $region1: #{tpu_custom_call.1} parent=0
    #allocation2 [shape = 'u8[4096]{0}', space=vmem, size = 0x1000, scoped, tag = 'input window, operand 0']
    #allocation3 [shape = 's32[2]{0}', space=sflag, size = 0x8, scoped, tag = 'scoped memory for tpu_custom_call.1']
    #allocation4 [shape = 's32[2]{0}', space=sflag, size = 0x8, scoped, tag = 'scoped memory for tpu_custom_call.1']
    #allocation5 [shape = 's32[2]{0}', space=sflag, size = 0x8, scoped, tag = 'scoped memory for tpu_custom_call.1']
    #allocation6 [shape = 'u8[65536]{0}', space=vmem, size = 0x10000, scoped, tag = 'input window, operand 1, single buffered']
    #allocation7 [shape = 's32[1]{0}', space=sflag, size = 0x4, scoped, tag = 'scoped memory for tpu_custom_call.1']
    #allocation8 [shape = 'u8[512]{0}', space=smem, size = 0x200, scoped, tag = 'input window, operand 3, single buffered']
    #allocation9 [shape = 'u8[512]{0}', space=smem, size = 0x200, scoped, tag = 'input window, operand 4, single buffered']
    #allocation10 [shape = 's32[1]{0}', space=sflag, size = 0x4, scoped, tag = 'scoped memory for tpu_custom_call.1']
    #allocation11 [shape = 'u8[8192]{0}', space=vmem, size = 0x2000, scoped, tag = 'output window, operand 0']
    %10 = vsyncpa [#allocation3], 0
    %s11 = scalar_lea.sflag [#allocation3], 1
    %12 = vsyncpa %s11, 0
    %13 = vsyncpa [#allocation7], 0
    %14 = vsyncpa [#allocation5], 0
    %15 = vsyncpa [#allocation10], 0
    %16 = vsyncpa [#allocation4], 0
    %s17 = scalar_lea.sflag [#allocation4], 1
    %18 = vsyncpa %s17, 0
    loop: start=0, step=1, limit=4
    $region2: #{tpu_custom_call.1} parent=1 // loop_pre_header
      _
    $region3: #{tpu_custom_call.1} parent=1 // loop_header
      %s20 = sphi 0, %s24
      %p21 = scmp.ge.s32.totalorder %s20, 4
      %s27 = sphi 0, %s46
      %s28 = sphi 0, %s42
      %s29 = sphi 0, %s38
      %s30 = sphi 0, %s27
      %s31 = sphi 0, %s28
      %s32 = sphi 0, %s29
      %s33 = sphi 0, %s30
      %s34 = sphi 0, %s31
      %s35 = sphi 0, %s32
      %s51 = sphi 0, %s53
      %s54 = sphi 0, %s51
      %s55 = sphi 0, %s54
      %s71 = sphi 0, %s55
      %s77 = sphi 0, %s79
      %s80 = sphi 0, %s77
      %s81 = sphi 0, %s80
      %s97 = sphi 0, %s81
      %s103 = sphi 0, %s105
      %s106 = sphi 0, %s103
      %s107 = sphi 0, %s106
      %s123 = sphi 0, %s107
      %s127 = sphi 0, %s127
      %s129 = sphi 0, %s127
      %s130 = sphi 0, %s129
      %s144 = sphi 0, %s130
      %s148 = sphi 0, %s148
      %s150 = sphi 0, %s148
      %s151 = sphi 0, %s150
      %s165 = sphi 0, %s151
      %s175 = sphi 0, %s177
      %s178 = sphi 0, %s175
      %s179 = sphi 0, %s178
      %s195 = sphi 0, %s179
    $region4: #{tpu_custom_call.1} parent=1 // loop_header_branch
      %23 = sbr.rel (%p21) target = $region8
    $region5: #{tpu_custom_call.1} parent=1 // loop_body
      %s25 = ssub.s32 %s20, 1
      %s26 = ssub.s32 %s20, 2
      %s36 = sadd.s32 1, %s29
      %p37 = scmp.ge.s32.totalorder %s36, 1
      %s38 = scalar_select %p37, 0, %s36
      %s39 = sadd.s32 1, %s28
      %s40 = scalar_select %p37, %s39, %s28
      %p41 = scmp.ge.s32.totalorder %s40, 2
      %s42 = scalar_select %p41, 0, %s40
      %s43 = sadd.s32 1, %s27
      %s44 = scalar_select %p41, %s43, %s27
      %p45 = scmp.ge.s32.totalorder %s44, 1
      %s46 = scalar_select %p45, 0, %s44
      %s47 = ssub.s32 %s28, %s42
      %s48 = ssub.s32 %s29, %s38
      %s49 = sor.u32 %s47, %s48
      %p50 = scmp.eq.s32.totalorder %s49, 0
      %s52 = sadd.s32 %s51, 1
      %s53 = scalar_select %p50, %s51, %s52
      %p56 = pneg %p50
      %p57 = scmp.eq.s32.totalorder %s20, 1
      %p58 = por %p56, %p57
      %p59 = scmp.ne.s32.totalorder %s51, %s54
      %p60 = scmp.eq.s32.totalorder %s20, 0
      %p61 = por %p59, %p60
      %p62 = scmp.ne.s32.totalorder %s51, %s54
      %p63 = scmp.eq.s32.totalorder %s25, 1
      %p64 = por %p62, %p63
      %p65 = scmp.ne.s32.totalorder %s54, %s55
      %p66 = scmp.eq.s32.totalorder %s25, 0
      %p67 = por %p65, %p66
      %p68 = scmp.ne.s32.totalorder %s54, %s55
      %p69 = scmp.eq.s32.totalorder %s26, 1
      %p70 = por %p68, %p69
      %p72 = scmp.ne.s32.totalorder %s55, %s71
      %p73 = scmp.eq.s32.totalorder %s26, 0
      %p74 = por %p72, %p73
      %s75 = ssub.s32 %s27, %s46
      %p76 = scmp.eq.s32.totalorder %s75, 0
      %s78 = sadd.s32 %s77, 1
      %s79 = scalar_select %p76, %s77, %s78
      %p82 = pneg %p76
      %p83 = scmp.eq.s32.totalorder %s20, 1
      %p84 = por %p82, %p83
      %p85 = scmp.ne.s32.totalorder %s77, %s80
      %p86 = scmp.eq.s32.totalorder %s20, 0
      %p87 = por %p85, %p86
      %p88 = scmp.ne.s32.totalorder %s77, %s80
      %p89 = scmp.eq.s32.totalorder %s25, 1
      %p90 = por %p88, %p89
      %p91 = scmp.ne.s32.totalorder %s80, %s81
      %p92 = scmp.eq.s32.totalorder %s25, 0
      %p93 = por %p91, %p92
      %p94 = scmp.ne.s32.totalorder %s80, %s81
      %p95 = scmp.eq.s32.totalorder %s26, 1
      %p96 = por %p94, %p95
      %p98 = scmp.ne.s32.totalorder %s81, %s97
      %p99 = scmp.eq.s32.totalorder %s26, 0
      %p100 = por %p98, %p99
      %s101 = ssub.s32 %s27, %s46
      %p102 = scmp.eq.s32.totalorder %s101, 0
      %s104 = sadd.s32 %s103, 1
      %s105 = scalar_select %p102, %s103, %s104
      %p108 = pneg %p102
      %p109 = scmp.eq.s32.totalorder %s20, 1
      %p110 = por %p108, %p109
      %p111 = scmp.ne.s32.totalorder %s103, %s106
      %p112 = scmp.eq.s32.totalorder %s20, 0
      %p113 = por %p111, %p112
      %p114 = scmp.ne.s32.totalorder %s103, %s106
      %p115 = scmp.eq.s32.totalorder %s25, 1
      %p116 = por %p114, %p115
      %p117 = scmp.ne.s32.totalorder %s106, %s107
      %p118 = scmp.eq.s32.totalorder %s25, 0
      %p119 = por %p117, %p118
      %p120 = scmp.ne.s32.totalorder %s106, %s107
      %p121 = scmp.eq.s32.totalorder %s26, 1
      %p122 = por %p120, %p121
      %p124 = scmp.ne.s32.totalorder %s107, %s123
      %p125 = scmp.eq.s32.totalorder %s26, 0
      %p126 = por %p124, %p125
      %s128 = sadd.s32 %s127, 1
      %p131 = scmp.eq.s32.totalorder %s20, 1
      %p132 = scmp.ne.s32.totalorder %s127, %s129
      %p133 = scmp.eq.s32.totalorder %s20, 0
      %p134 = por %p132, %p133
      %p135 = scmp.ne.s32.totalorder %s127, %s129
      %p136 = scmp.eq.s32.totalorder %s25, 1
      %p137 = por %p135, %p136
      %p138 = scmp.ne.s32.totalorder %s129, %s130
      %p139 = scmp.eq.s32.totalorder %s25, 0
      %p140 = por %p138, %p139
      %p141 = scmp.ne.s32.totalorder %s129, %s130
      %p142 = scmp.eq.s32.totalorder %s26, 1
      %p143 = por %p141, %p142
      %p145 = scmp.ne.s32.totalorder %s130, %s144
      %p146 = scmp.eq.s32.totalorder %s26, 0
      %p147 = por %p145, %p146
      %s149 = sadd.s32 %s148, 1
      %p152 = scmp.eq.s32.totalorder %s20, 1
      %p153 = scmp.ne.s32.totalorder %s148, %s150
      %p154 = scmp.eq.s32.totalorder %s20, 0
      %p155 = por %p153, %p154
      %p156 = scmp.ne.s32.totalorder %s148, %s150
      %p157 = scmp.eq.s32.totalorder %s25, 1
      %p158 = por %p156, %p157
      %p159 = scmp.ne.s32.totalorder %s150, %s151
      %p160 = scmp.eq.s32.totalorder %s25, 0
      %p161 = por %p159, %p160
      %p162 = scmp.ne.s32.totalorder %s150, %s151
      %p163 = scmp.eq.s32.totalorder %s26, 1
      %p164 = por %p162, %p163
      %p166 = scmp.ne.s32.totalorder %s151, %s165
      %p167 = scmp.eq.s32.totalorder %s26, 0
      %p168 = por %p166, %p167
      %s169 = ssub.s32 %s28, %s42
      %s170 = ssub.s32 %s29, %s38
      %s171 = sor.u32 %s169, %s170
      %s172 = ssub.s32 %s27, %s46
      %s173 = sor.u32 %s171, %s172
      %p174 = scmp.eq.s32.totalorder %s173, 0
      %s176 = sadd.s32 %s175, 1
      %s177 = scalar_select %p174, %s175, %s176
      %p180 = pneg %p174
      %p181 = scmp.eq.s32.totalorder %s20, 1
      %p182 = por %p180, %p181
      %p183 = scmp.ne.s32.totalorder %s175, %s178
      %p184 = scmp.eq.s32.totalorder %s20, 0
      %p185 = por %p183, %p184
      %p186 = scmp.ne.s32.totalorder %s175, %s178
      %p187 = scmp.eq.s32.totalorder %s25, 1
      %p188 = por %p186, %p187
      %p189 = scmp.ne.s32.totalorder %s178, %s179
      %p190 = scmp.eq.s32.totalorder %s25, 0
      %p191 = por %p189, %p190
      %p192 = scmp.ne.s32.totalorder %s178, %s179
      %p193 = scmp.eq.s32.totalorder %s26, 1
      %p194 = por %p192, %p193
      %p196 = scmp.ne.s32.totalorder %s179, %s195
      %p197 = scmp.eq.s32.totalorder %s26, 0
      %p198 = por %p196, %p197
      %p199 = scmp.le.s32.totalorder 1, %s20
      %p200 = scmp.lt.s32.totalorder %s20, 3
      %p201 = pnand %p199, %p200
      %p202 = pneg %p201
      // Predicated region
      $region9: #{tpu_custom_call.1} parent=5 // pred_check
        _
      $region10: #{tpu_custom_call.1} parent=5 // pred_check_branch
        %204 = sbr.rel (%p201) target = $region12
      $region11: #{tpu_custom_call.1} parent=5 // pred_region
        %s205 = ssub.s32 %s20, 1
        // Predicated region
        $region13: #{tpu_custom_call.1} parent=11 // pred_check
          %p206 = pneg %p93
        $region14: #{tpu_custom_call.1} parent=11 // pred_check_branch
          %208 = sbr.rel (%p206) target = $region16
        $region15: #{tpu_custom_call.1} parent=11 // pred_region
          %s209 = smul.u32 2, %s30
          %s211 = ssub.s32 2048, 2048
          %212 = vsyncadd [#allocation7], %s211
          %s213 = smul.addr %s209, 64
          %s214 = scalar_lea.hbm %s1, %s213
          %s215 = sshll.u32 [#allocation6], 4
          %s216 = int_to_ptr.vmem [resolvable:$true] %s215
          %221 = dma.hbm_to_vmem [thread:$0]  %s214, 2048, %s216, [#allocation7], 128, 128, 8
        $region16: #{tpu_custom_call.1} parent=11 // pred_fallthru
          _
        // Predicated region
        $region17: #{tpu_custom_call.1} parent=11 // pred_check
          %p222 = pneg %p119
        $region18: #{tpu_custom_call.1} parent=11 // pred_check_branch
          %224 = sbr.rel (%p222) target = $region20
        $region19: #{tpu_custom_call.1} parent=11 // pred_region
          %p225 = scmp.lt.s32.totalorder %s30, 0
          %s226 = scalar_select %p225, %s30, 0
          %s227 = scalar_lea.vmem %s2, %s226
        $region20: #{tpu_custom_call.1} parent=11 // pred_fallthru
          _
        // Predicated region
        $region21: #{tpu_custom_call.1} parent=11 // pred_check
          %p228 = pneg %p140
        $region22: #{tpu_custom_call.1} parent=11 // pred_check_branch
          %230 = sbr.rel (%p228) target = $region24
        $region23: #{tpu_custom_call.1} parent=11 // pred_region
          %s232 = ssub.s32 16, 16
          %233 = vsyncadd [#allocation5], %s232
          %s235 = sshll.u32 %s3, 4
          %s236 = int_to_ptr.vmem [resolvable:$true] %s235
          %238 = dma.vmem_to_smem %s236, 16, [#allocation8], [#allocation5]
        $region24: #{tpu_custom_call.1} parent=11 // pred_fallthru
          _
        // Predicated region
        $region25: #{tpu_custom_call.1} parent=11 // pred_check
          %p239 = pneg %p161
        $region26: #{tpu_custom_call.1} parent=11 // pred_check_branch
          %241 = sbr.rel (%p239) target = $region28
        $region27: #{tpu_custom_call.1} parent=11 // pred_region
          %s243 = ssub.s32 16, 16
          %244 = vsyncadd [#allocation10], %s243
          %s246 = sshll.u32 %s4, 4
          %s247 = int_to_ptr.vmem [resolvable:$true] %s246
          %249 = dma.vmem_to_smem %s247, 16, [#allocation9], [#allocation10]
        $region28: #{tpu_custom_call.1} parent=11 // pred_fallthru
          _
      $region12: #{tpu_custom_call.1} parent=5 // pred_fallthru
        _
      %p250 = scmp.lt.s32.totalorder %s20, 2
      // Predicated region
      $region29: #{tpu_custom_call.1} parent=5 // pred_check
        %p251 = pneg %p250
      $region30: #{tpu_custom_call.1} parent=5 // pred_check_branch
        %253 = sbr.rel (%p251) target = $region32
      $region31: #{tpu_custom_call.1} parent=5 // pred_region
        // Predicated region
        $region33: #{tpu_custom_call.1} parent=31 // pred_check
          %p254 = pneg %p61
        $region34: #{tpu_custom_call.1} parent=31 // pred_check_branch
          %256 = sbr.rel (%p254) target = $region36
        $region35: #{tpu_custom_call.1} parent=31 // pred_region
          %s257 = sand.u32 %s51, 1
          %s258 = scalar_lea.sflag [#allocation3], %s257
          %s259 = sand.u32 %s51, 1
          %s260 = smul.addr %s259, 4
          %s261 = scalar_lea.vmem [#allocation2], %s260
          %s263 = ssub.s32 64, 64
          %264 = vsyncadd %s258, %s263
          %s265 = sadd.s32 %s29, %s28
          %s266 = smul.addr %s265, 64
          %s267 = scalar_lea.hbm %s0, %s266
          %s269 = sshll.u32 %s261, 4
          %s270 = int_to_ptr.vmem [resolvable:$true] %s269
          %272 = dma.hbm_to_vmem [thread:$0]  %s267, 64, %s270, %s258
        $region36: #{tpu_custom_call.1} parent=31 // pred_fallthru
          _
      $region32: #{tpu_custom_call.1} parent=5 // pred_fallthru
        _
      %p273 = scmp.le.s32.totalorder 1, %s20
      %p274 = scmp.lt.s32.totalorder %s20, 3
      %p275 = pnand %p273, %p274
      %p276 = pneg %p275
      // Predicated region
      $region37: #{tpu_custom_call.1} parent=5 // pred_check
        _
      $region38: #{tpu_custom_call.1} parent=5 // pred_check_branch
        %278 = sbr.rel (%p275) target = $region40
      $region39: #{tpu_custom_call.1} parent=5 // pred_region
        %s279 = ssub.s32 %s20, 1
        %s280 = sand.u32 %s54, 1
        %s281 = scalar_lea.sflag [#allocation3], %s280
        %s282 = sand.u32 %s54, 1
        %s283 = smul.addr %s282, 4
        %s284 = scalar_lea.vmem [#allocation2], %s283
        // Predicated region
        $region41: #{tpu_custom_call.1} parent=39 // pred_check
          %p285 = pneg %p67
        $region42: #{tpu_custom_call.1} parent=39 // pred_check_branch
          %287 = sbr.rel (%p285) target = $region44
        $region43: #{tpu_custom_call.1} parent=39 // pred_region
          %288 = dma.done %s281, 64
        $region44: #{tpu_custom_call.1} parent=39 // pred_fallthru
          _
        // Predicated region
        $region45: #{tpu_custom_call.1} parent=39 // pred_check
          %p289 = pneg %p93
        $region46: #{tpu_custom_call.1} parent=39 // pred_check_branch
          %291 = sbr.rel (%p289) target = $region48
        $region47: #{tpu_custom_call.1} parent=39 // pred_region
          %292 = dma.done [#allocation7], 2048
        $region48: #{tpu_custom_call.1} parent=39 // pred_fallthru
          _
        // Predicated region
        $region49: #{tpu_custom_call.1} parent=39 // pred_check
          %p293 = pneg %p140
        $region50: #{tpu_custom_call.1} parent=39 // pred_check_branch
          %295 = sbr.rel (%p293) target = $region52
        $region51: #{tpu_custom_call.1} parent=39 // pred_region
          %296 = dma.done [#allocation5], 16
        $region52: #{tpu_custom_call.1} parent=39 // pred_fallthru
          _
        // Predicated region
        $region53: #{tpu_custom_call.1} parent=39 // pred_check
          %p297 = pneg %p161
        $region54: #{tpu_custom_call.1} parent=39 // pred_check_branch
          %299 = sbr.rel (%p297) target = $region56
        $region55: #{tpu_custom_call.1} parent=39 // pred_region
          %300 = dma.done [#allocation10], 16
        $region56: #{tpu_custom_call.1} parent=39 // pred_fallthru
          _
        %301 = sfence
        %s302 = sand.u32 %s54, 1
        %s303 = scalar_lea.sflag [#allocation3], %s302
        %s304 = sand.u32 %s54, 1
        %s305 = smul.addr %s304, 4
        %s306 = scalar_lea.vmem [#allocation2], %s305
        %p307 = pneg %p67
        %p308 = pneg %p64
        %p309 = pneg %p93
        %p310 = pneg %p90
        %p311 = scmp.lt.s32.totalorder %s30, 0
        %s312 = scalar_select %p311, %s30, 0
        %s313 = scalar_lea.vmem %s2, %s312
        %p314 = pneg %p119
        %p315 = pneg %p116
        %p316 = pneg %p140
        %p317 = pneg %p137
        %p318 = pneg %p161
        %p319 = pneg %p158
        %p320 = pneg %p191
        %p321 = pneg %p188
        %s322 = sand.u32 %s178, 1
        %s323 = scalar_lea.sflag [#allocation4], %s322
        %s324 = sand.u32 %s178, 1
        %s325 = smul.addr %s324, 8
        %s326 = scalar_lea.vmem [#allocation11], %s325
        %s327 = smul.u32 2, %s30
        %p328 = scmp.lt.s32.totalorder %s30, 0
        %s329 = scalar_select %p328, %s30, 0
        %s330 = scalar_lea.vmem %s2, %s329
        %v332 = vld [vmem:[%s284] sm:$0xf]
        %v333 = vld [vmem:[#allocation6] sm:$0xff]
        %v334 = vld [vmem:[#allocation6 + $0x8] sm:$0xff]
        %v335 = vld [vmem:[#allocation6 + $0x10] sm:$0xff]
        %v336 = vld [vmem:[#allocation6 + $0x18] sm:$0xff]
        %v337 = vld [vmem:[#allocation6 + $0x20] sm:$0xff]
        %v338 = vld [vmem:[#allocation6 + $0x28] sm:$0xff]
        %v339 = vld [vmem:[#allocation6 + $0x30] sm:$0xff]
        %v340 = vld [vmem:[#allocation6 + $0x38] sm:$0xff]
        %v341 = vld [vmem:[#allocation6 + $0x40] sm:$0xff]
        %v342 = vld [vmem:[#allocation6 + $0x48] sm:$0xff]
        %v343 = vld [vmem:[#allocation6 + $0x50] sm:$0xff]
        %v344 = vld [vmem:[#allocation6 + $0x58] sm:$0xff]
        %v345 = vld [vmem:[#allocation6 + $0x60] sm:$0xff]
        %v346 = vld [vmem:[#allocation6 + $0x68] sm:$0xff]
        %v347 = vld [vmem:[#allocation6 + $0x70] sm:$0xff]
        %v348 = vld [vmem:[#allocation6 + $0x78] sm:$0xff]
        %v365 = vunpack.c.l.b16 %v333
        %v366 = vunpack.c.h.b16 %v333
        %v367 = vunpack.c.l.b16 %v334
        %v368 = vunpack.c.h.b16 %v334
        %v369 = vunpack.c.l.b16 %v335
        %v370 = vunpack.c.h.b16 %v335
        %v371 = vunpack.c.l.b16 %v336
        %v372 = vunpack.c.h.b16 %v336
        %v373 = vunpack.c.l.b16 %v337
        %v374 = vunpack.c.h.b16 %v337
        %v375 = vunpack.c.l.b16 %v338
        %v376 = vunpack.c.h.b16 %v338
        %v377 = vunpack.c.l.b16 %v339
        %v378 = vunpack.c.h.b16 %v339
        %v379 = vunpack.c.l.b16 %v340
        %v380 = vunpack.c.h.b16 %v340
        %v381 = vunpack.c.l.b16 %v341
        %v382 = vunpack.c.h.b16 %v341
        %v383 = vunpack.c.l.b16 %v342
        %v384 = vunpack.c.h.b16 %v342
        %v385 = vunpack.c.l.b16 %v343
        %v386 = vunpack.c.h.b16 %v343
        %v387 = vunpack.c.l.b16 %v344
        %v388 = vunpack.c.h.b16 %v344
        %v389 = vunpack.c.l.b16 %v345
        %v390 = vunpack.c.h.b16 %v345
        %v391 = vunpack.c.l.b16 %v346
        %v392 = vunpack.c.h.b16 %v346
        %v393 = vunpack.c.l.b16 %v347
        %v394 = vunpack.c.h.b16 %v347
        %v395 = vunpack.c.l.b16 %v348
        %v396 = vunpack.c.h.b16 %v348
        %v397 = vpack.c.b16 %v367, %v365
        %v398 = vpack.c.b16 %v368, %v366
        %v399 = vpack.c.b16 %v371, %v369
        %v400 = vpack.c.b16 %v372, %v370
        %v401 = vpack.c.b16 %v375, %v373
        %v402 = vpack.c.b16 %v376, %v374
        %v403 = vpack.c.b16 %v379, %v377
        %v404 = vpack.c.b16 %v380, %v378
        %v405 = vpack.c.b16 %v383, %v381
        %v406 = vpack.c.b16 %v384, %v382
        %v407 = vpack.c.b16 %v387, %v385
        %v408 = vpack.c.b16 %v388, %v386
        %v409 = vpack.c.b16 %v391, %v389
        %v410 = vpack.c.b16 %v392, %v390
        %v411 = vpack.c.b16 %v395, %v393
        %v412 = vpack.c.b16 %v396, %v394
        %429 = vmatprep.subr.bf16.mxu0 %v412
        %430 = vmatpush1.bf16.msra.mxu0 %v411
        %431 = vmatprep.subr.bf16.mxu0 %v410
        %432 = vmatpush1.bf16.msra.mxu0 %v409
        %433 = vmatprep.subr.bf16.mxu0 %v408
        %434 = vmatpush1.bf16.msra.mxu0 %v407
        %435 = vmatprep.subr.bf16.mxu0 %v406
        %436 = vmatpush1.bf16.msra.mxu0 %v405
        %437 = vmatprep.subr.bf16.mxu0 %v404
        %438 = vmatpush1.bf16.msra.mxu0 %v403
        %439 = vmatprep.subr.bf16.mxu0 %v402
        %440 = vmatpush1.bf16.msra.mxu0 %v401
        %441 = vmatprep.subr.bf16.mxu0 %v400
        %442 = vmatpush1.bf16.msra.mxu0 %v399
        %443 = vmatprep.subr.bf16.mxu0 %v398
        %444 = vmatpush1.bf16.msra.mxu0 %v397
        %445 = vmatprep.subr.bf16.mxu0 0
        %446 = vmatpush2.bf16.msra.mxu0 0
        %447 = vmatprep.subr.bf16.mxu0 0
        %448 = vmatpush2.bf16.msra.mxu0 0
        %449 = vmatprep.subr.bf16.mxu0 0
        %450 = vmatpush2.bf16.msra.mxu0 0
        %451 = vmatprep.subr.bf16.mxu0 0
        %452 = vmatpush2.bf16.msra.mxu0 0
        %453 = vmatprep.subr.bf16.mxu0 0
        %454 = vmatpush2.bf16.msra.mxu0 0
        %455 = vmatprep.subr.bf16.mxu0 0
        %456 = vmatpush2.bf16.msra.mxu0 0
        %457 = vmatprep.subr.bf16.mxu0 0
        %458 = vmatpush2.bf16.msra.mxu0 0
        %459 = vmatprep.subr.bf16.mxu0 0
        %460 = vmatpush2.bf16.msra.mxu0 0
        %461 = vmatprep.mubr.bf16.mxu0 0
        %462 = vmatmul.mubr.bf16.gmra.mxu0 %v332
        %v463 = vpop.f32.mrf.mxu0
        %v464 = vadd.f32 0.0, %v463
        %v465 = vpop.f32.mrf.mxu0
        %v466 = vadd.f32 0.0, %v465
        %v467 = vpop.f32.mrf.mxu0
        %v468 = vpop.f32.mrf.mxu0
        %469 = vdwg.mxu0
        %v470 = vld [vmem:[%s330] sm:$0x1]
        %s471 = sld [smem:[#allocation8 + %s31]]
        %s472 = sld [smem:[#allocation9 + %s31]]
        %v473 = vstv %s471
        %v474 = vmul.f32 %v473, %v464
        %v475 = vstv %s472
        %v476 = vmul.f32 %v475, %v466
        %v477 = vadd.f32 %v474, %v476
        %s478 = sadd.f32 %s471, 1.0
        %v479 = vstv %s478
        %v480 = vmul.f32 %v470, %v479
        %v481 = vadd.f32 %v480, %v475
        %v483 = vlaneseq
        %v484 = vshrl.u32 %v483, 7
        %v485 = vsub.s32 0, %v484
        %v486 = vrot.slane %v481, %v485
        %v488 = vadd.f32 %v477, %v486
        %489 = vst [vmem:[%s326] sm:$0xff] %v488
        %s490 = sand.u32 %s178, 1
        %s491 = scalar_lea.sflag [#allocation4], %s490
        %s492 = sand.u32 %s178, 1
        %s493 = smul.addr %s492, 8
        %s494 = scalar_lea.vmem [#allocation11], %s493
        // Predicated region
        $region57: #{tpu_custom_call.1} parent=39 // pred_check
          %p495 = pneg %p188
        $region58: #{tpu_custom_call.1} parent=39 // pred_check_branch
          %497 = sbr.rel (%p495) target = $region60
        $region59: #{tpu_custom_call.1} parent=39 // pred_region
          %s499 = ssub.s32 128, 128
          %500 = vsyncadd %s491, %s499
          %s501 = sadd.s32 %s30, %s32
          %s502 = sadd.s32 %s501, %s31
          %s503 = smul.addr %s502, 128
          %s504 = scalar_lea.hbm %s5, %s503
          %s506 = sshll.u32 %s494, 4
          %s507 = int_to_ptr.vmem [resolvable:$true] %s506
          %509 = dma.vmem_to_hbm [thread:$0]  %s507, 128, %s504, %s491
        $region60: #{tpu_custom_call.1} parent=39 // pred_fallthru
          _
      $region40: #{tpu_custom_call.1} parent=5 // pred_fallthru
        _
      %p510 = scmp.le.s32.totalorder 2, %s20
      // Predicated region
      $region61: #{tpu_custom_call.1} parent=5 // pred_check
        %p511 = pneg %p510
      $region62: #{tpu_custom_call.1} parent=5 // pred_check_branch
        %513 = sbr.rel (%p511) target = $region64
      $region63: #{tpu_custom_call.1} parent=5 // pred_region
        %s514 = ssub.s32 %s20, 2
        // Predicated region
        $region65: #{tpu_custom_call.1} parent=63 // pred_check
          %p515 = pneg %p194
        $region66: #{tpu_custom_call.1} parent=63 // pred_check_branch
          %517 = sbr.rel (%p515) target = $region68
        $region67: #{tpu_custom_call.1} parent=63 // pred_region
          %s518 = sand.u32 %s179, 1
          %s519 = scalar_lea.sflag [#allocation4], %s518
          %s520 = sand.u32 %s179, 1
          %s521 = smul.addr %s520, 8
          %s522 = scalar_lea.vmem [#allocation11], %s521
          %523 = dma.done %s519, 128
        $region68: #{tpu_custom_call.1} parent=63 // pred_fallthru
          _
      $region64: #{tpu_custom_call.1} parent=5 // pred_fallthru
        _
    $region6: #{tpu_custom_call.1} parent=1 // loop_footer
      %s24 = sadd.s32 1, %s20
    $region7: #{tpu_custom_call.1} parent=1 // loop_footer_branch
      %19 = sbr.rel target = $region3
    $region8: #{tpu_custom_call.1} parent=1 // loop_exit
      _
    %524 = vsyncpa [#allocation3], 1
    %s525 = scalar_lea.sflag [#allocation3], 1
    %526 = vsyncpa %s525, 1
    %527 = vsyncpa [#allocation7], 1
    %528 = vsyncpa [#allocation4], 1
    %s529 = scalar_lea.sflag [#allocation4], 1
    %530 = vsyncpa %s529, 1
    %531 = vsyncpa [#allocation5], 1
    %s532 = scalar_lea.sflag [#allocation5], 1
    %533 = vsyncpa %s532, 1
    %534 = vsyncpa [#allocation10], 1

</llo_original>
